<compile_context>
chip_gen: v7x
topology: tpu7x:2x2x1
jax: 0.10.0
libtpu: 0.0.40
codegen_flags: <defaults>
</compile_context>

<pallas_src>
import math

import jax
import jax.numpy as jnp
from jax.experimental import pallas as pl
from jax.experimental.pallas import tpu as pltpu

_LANES = 128
_TILE_BYTES_TARGET = 4 * 1024 * 1024  # per-buffer VMEM tile budget


class PallasLambda:
    """Pallas equivalent of `Lambda(nn.Module)`: forward(*args) = lambd(*args).

    `lambd` must be an elementwise, shape-preserving jnp-expressible callable.
    All inputs must share the same shape (dtypes may differ; the output dtype
    follows the lambda's natural promotion).
    """

    def __init__(self, lambd):
        self.lambd = lambd

    def __call__(self, *args):
        lambd = self.lambd
        x0 = args[0]
        n_in = len(args)

        for a in args:
            assert a.shape == x0.shape, "all inputs must share a shape"

        # Output shape/dtype from the lambda itself (handles dtype promotion).
        out_abs = jax.eval_shape(lambd, *args)
        assert out_abs.shape == x0.shape, (
            "PallasLambda only supports shape-preserving elementwise lambdas")
        out_dtype = out_abs.dtype

        total = math.prod(x0.shape) if x0.shape else 1

        # ---- lane-dense 2D layout --------------------------------------
        # cols: multiple of 128 so stores are unmasked full-lane vst.
        cols = 512 if total >= 512 * 8 else _LANES

        itemsizes = [jnp.dtype(a.dtype).itemsize for a in args]
        itemsizes.append(jnp.dtype(out_dtype).itemsize)
        max_itemsize = max(itemsizes)

        # Largest row-tile that keeps each buffer <= ~4 MiB (rows mult. of 8).
        tile_rows = max(8, (_TILE_BYTES_TARGET // (cols * max_itemsize)) // 8 * 8)

        rows_needed = pl.cdiv(total, cols)
        if rows_needed <= tile_rows:
            # Small problem: single grid step over the whole flattened array
            # (block == full array, so no (8,128) divisibility requirement).
            rows = rows_needed
            tile_rows = rows
            grid = (1,)
        else:
            rows = pl.cdiv(rows_needed, tile_rows) * tile_rows
            grid = (rows // tile_rows,)

        padded = rows * cols

        def flatten(a):
            flat = a.reshape(-1)
            if padded != total:
                flat = jnp.pad(flat, (0, padded - total))
            return flat.reshape(rows, cols)

        flat_args = [flatten(a) for a in args]

        def kernel(*refs):
            in_refs = refs[:n_in]
            out_ref = refs[n_in]
            out_ref[...] = lambd(*(r[...] for r in in_refs)).astype(out_ref.dtype)

        spec = pl.BlockSpec((tile_rows, cols), lambda i: (i, 0))

        out_flat = pl.pallas_call(
            kernel,
            out_shape=jax.ShapeDtypeStruct((rows, cols), out_dtype),
            grid=grid,
            in_specs=[spec] * n_in,
            out_specs=spec,
            compiler_params=pltpu.CompilerParams(
                dimension_semantics=("parallel",),
                vmem_limit_bytes=64 * 1024 * 1024,
            ),
        )(*flat_args)

        out = out_flat.reshape(-1)
        if padded != total:
            out = out[:total]
        return out.reshape(x0.shape)


if __name__ == "__main__":
    key = jax.random.PRNGKey(0)
    kx, ky, ka, kb = jax.random.split(key, 4)

    # Representative elementwise lambda (as deepmatcher passes to Lambda).
    lambd = lambda a, b: a * jax.nn.sigmoid(b) + b
    module = PallasLambda(lambd)

    # Small shape consistent with the generic module: batch=2, channels=4,
    # spatial=16x16 (total divisible by 128 -> no padding path).
    x = jax.random.normal(kx, (2, 4, 16, 16), dtype=jnp.float32)
    y = jax.random.normal(ky, (2, 4, 16, 16), dtype=jnp.float32)
    out = jax.block_until_ready(module(x, y))
    ref = lambd(x, y)
    assert out.shape == ref.shape and out.dtype == ref.dtype
    assert jnp.allclose(out, ref, atol=1e-5, rtol=1e-5)

    # Second tiny case exercising the padding path (total not a multiple
    # of 128) and a single-input lambda.
    lambd2 = lambda t: jnp.tanh(t) * 2.0 + 1.0
    module2 = PallasLambda(lambd2)
    z = jax.random.normal(ka, (2, 3, 5, 7), dtype=jnp.float32)
    out2 = jax.block_until_ready(module2(z))
    ref2 = lambd2(z)
    assert out2.shape == ref2.shape and out2.dtype == ref2.dtype
    assert jnp.allclose(out2, ref2, atol=1e-5, rtol=1e-5)

    print("KERNEL_OK")
</pallas_src>

<mosaic_0001>
module attributes {stable_mosaic.version = 11 : i64} {
  func.func @kernel(%arg0: i32, %arg1: memref<16x128xf32, #tpu.memory_space<vmem>>, %arg2: memref<16x128xf32, #tpu.memory_space<vmem>>, %arg3: memref<16x128xf32, #tpu.memory_space<vmem>>) attributes {dimension_semantics = [#tpu.dimension_semantics<parallel>], iteration_bounds = array<i64: 1>, scalar_prefetch = 0 : i64, scratch_operands = 0 : i64, tpu.core_type = #tpu.core_type<tc>, window_params = [{transform_indices = @transform_0, window_bounds = array<i64: 16, 128>}, {transform_indices = @transform_1, window_bounds = array<i64: 16, 128>}, {transform_indices = @transform_2, window_bounds = array<i64: 16, 128>}]} {
    %c0 = arith.constant 0 : index
    %c0_0 = arith.constant 0 : index
    %0 = vector.load %arg1[%c0, %c0_0] : memref<16x128xf32, #tpu.memory_space<vmem>>, vector<16x128xf32>
    %c0_1 = arith.constant 0 : index
    %c0_2 = arith.constant 0 : index
    %1 = vector.load %arg2[%c0_1, %c0_2] : memref<16x128xf32, #tpu.memory_space<vmem>>, vector<16x128xf32>
    %2 = arith.negf %1 : vector<16x128xf32>
    %3 = math.exp %2 : vector<16x128xf32>
    %cst = arith.constant 1.000000e+00 : f32
    %4 = vector.broadcast %cst : f32 to vector<16x128xf32>
    %5 = arith.addf %4, %3 : vector<16x128xf32>
    %6 = arith.divf %4, %5 : vector<16x128xf32>
    %7 = arith.mulf %0, %6 : vector<16x128xf32>
    %8 = arith.addf %7, %1 : vector<16x128xf32>
    %c0_3 = arith.constant 0 : index
    %c0_4 = arith.constant 0 : index
    %9 = vector.load %arg3[%c0_3, %c0_4] : memref<16x128xf32, #tpu.memory_space<vmem>>, vector<16x128xf32>
    tpu.vector_store %arg3[%c0_3, %c0_4], %8 {strides = array<i32>} : memref<16x128xf32, #tpu.memory_space<vmem>>, vector<16x128xf32>,
    return
  }
  func.func @transform_0(%arg0: i32) -> (i32, i32) {
    %c0_i32 = arith.constant 0 : i32
    %c0_i32_0 = arith.constant 0 : i32
    return %arg0, %c0_i32 : i32, i32
  }
  func.func @transform_1(%arg0: i32) -> (i32, i32) {
    %c0_i32 = arith.constant 0 : i32
    %c0_i32_0 = arith.constant 0 : i32
    return %arg0, %c0_i32 : i32, i32
  }
  func.func @transform_2(%arg0: i32) -> (i32, i32) {
    %c0_i32 = arith.constant 0 : i32
    %c0_i32_0 = arith.constant 0 : i32
    return %arg0, %c0_i32 : i32, i32
  }
}

</mosaic_0001>

<llo_original>
// kernel: tpu_custom_call.1
$region0: #{tpu_custom_call.1}
  #allocation0 [shape = 'u32[]', space=smem, size = 0x4, offset = 0x4, fixed_abs, tag = 'smem constant byte address 0x4 - core index']
  #allocation1 [shape = 'u32[144,128]{1,0:T(1,128)}', space=vmem, size = 0x12000, scoped, tag = 'internal scratch']
  %s0 = inlined_call_operand.hbm [shape: f32[16,128], index: 0, kind: input, shape index: {}]
  %s1 = inlined_call_operand.hbm [shape: f32[16,128], index: 1, kind: input, shape index: {}]
  %s2 = inlined_call_operand.hbm [shape: f32[16,128], index: 2, kind: output, shape index: {}]
  %s3 = sld [smem:[#allocation0]]
  $region26: #{tpu_custom_call.1} parent=0
    _
  %s5 = ssub.s32 1, %s3
  %s6 = scalar_select 0, %s5, %s3
  $region1: #{tpu_custom_call.1} parent=0
    #allocation2 [shape = 'u8[8192]{0}', space=vmem, size = 0x2000, scoped, tag = 'input window, operand 0, single buffered']
    #allocation3 [shape = 's32[1]{0}', space=sflag, size = 0x4, scoped, tag = 'scoped memory for tpu_custom_call.1']
    #allocation4 [shape = 's32[1]{0}', space=sflag, size = 0x4, scoped, tag = 'scoped memory for tpu_custom_call.1']
    #allocation5 [shape = 'u8[8192]{0}', space=vmem, size = 0x2000, scoped, tag = 'input window, operand 1, single buffered']
    #allocation6 [shape = 's32[1]{0}', space=sflag, size = 0x4, scoped, tag = 'scoped memory for tpu_custom_call.1']
    #allocation7 [shape = 'u8[8192]{0}', space=vmem, size = 0x2000, scoped, tag = 'output window, operand 0, single buffered']
    %7 = vsyncpa [#allocation3], 0
    %8 = vsyncpa [#allocation6], 0
    %9 = vsyncpa [#allocation4], 0
    // Predicated region
    $region2: #{tpu_custom_call.1} parent=1 // pred_check
      _
    $region3: #{tpu_custom_call.1} parent=1 // pred_check_branch
      %11 = sbr.rel (0) target = $region5
    $region4: #{tpu_custom_call.1} parent=1 // pred_region
      %s13 = ssub.s32 256, 256
      %14 = vsyncadd [#allocation3], %s13
      %s15 = sshll.u32 [#allocation2], 4
      %s16 = int_to_ptr.vmem [resolvable:$true] %s15
      %21 = dma.hbm_to_vmem [thread:$0]  %s0, 256, %s16, [#allocation3], 128, 128, 8
    $region5: #{tpu_custom_call.1} parent=1 // pred_fallthru
      _
    // Predicated region
    $region6: #{tpu_custom_call.1} parent=1 // pred_check
      _
    $region7: #{tpu_custom_call.1} parent=1 // pred_check_branch
      %23 = sbr.rel (0) target = $region9
    $region8: #{tpu_custom_call.1} parent=1 // pred_region
      %s25 = ssub.s32 256, 256
      %26 = vsyncadd [#allocation6], %s25
      %s27 = sshll.u32 [#allocation5], 4
      %s28 = int_to_ptr.vmem [resolvable:$true] %s27
      %33 = dma.hbm_to_vmem [thread:$0]  %s1, 256, %s28, [#allocation6], 128, 128, 8
    $region9: #{tpu_custom_call.1} parent=1 // pred_fallthru
      _
    // Predicated region
    $region10: #{tpu_custom_call.1} parent=1 // pred_check
      _
    $region11: #{tpu_custom_call.1} parent=1 // pred_check_branch
      %35 = sbr.rel (0) target = $region13
    $region12: #{tpu_custom_call.1} parent=1 // pred_region
      %36 = dma.done [#allocation3], 256
    $region13: #{tpu_custom_call.1} parent=1 // pred_fallthru
      _
    // Predicated region
    $region14: #{tpu_custom_call.1} parent=1 // pred_check
      _
    $region15: #{tpu_custom_call.1} parent=1 // pred_check_branch
      %38 = sbr.rel (0) target = $region17
    $region16: #{tpu_custom_call.1} parent=1 // pred_region
      %39 = dma.done [#allocation6], 256
    $region17: #{tpu_custom_call.1} parent=1 // pred_fallthru
      _
    %v40 = vld [vmem:[#allocation2] sm:$0xff]
    %v41 = vld [vmem:[#allocation2 + $0x8] sm:$0xff]
    %v42 = vld [vmem:[#allocation5] sm:$0xff]
    %v43 = vld [vmem:[#allocation5 + $0x8] sm:$0xff]
    %v44 = vxor.u32 %v42, 2147483648
    %v45 = vxor.u32 %v43, 2147483648
    %v46 = vmul.f32 %v44, 1.442695
    %v47 = vpow.pop %v46
    %v48 = vmul.f32 %v45, 1.442695
    %v49 = vpow.pop %v48
    %v50 = vadd.f32 %v47, 1.0
    %v51 = vadd.f32 %v49, 1.0
    %v52 = vrcp.pop %v50
    %v53 = vmul.f32 1.0, %v52
    %v54 = vrcp.pop %v51
    %v55 = vmul.f32 1.0, %v54
    %v56 = vmul.f32 %v40, %v53
    %v57 = vmul.f32 %v41, %v55
    %v58 = vadd.f32 %v56, %v42
    %v59 = vadd.f32 %v57, %v43
    %60 = vst [vmem:[#allocation7] sm:$0xff] %v58
    %61 = vst [vmem:[#allocation7 + $0x8] sm:$0xff] %v59
    // Predicated region
    $region18: #{tpu_custom_call.1} parent=1 // pred_check
      _
    $region19: #{tpu_custom_call.1} parent=1 // pred_check_branch
      %63 = sbr.rel (0) target = $region21
    $region20: #{tpu_custom_call.1} parent=1 // pred_region
      %s65 = ssub.s32 256, 256
      %66 = vsyncadd [#allocation4], %s65
      %s67 = sshll.u32 [#allocation7], 4
      %s68 = int_to_ptr.vmem [resolvable:$true] %s67
      %73 = dma.vmem_to_hbm [thread:$0]  %s68, 256, %s2, [#allocation4], 128, 128, 8
    $region21: #{tpu_custom_call.1} parent=1 // pred_fallthru
      _
    // Predicated region
    $region22: #{tpu_custom_call.1} parent=1 // pred_check
      _
    $region23: #{tpu_custom_call.1} parent=1 // pred_check_branch
      %75 = sbr.rel (0) target = $region25
    $region24: #{tpu_custom_call.1} parent=1 // pred_region
      %76 = dma.done [#allocation4], 256
    $region25: #{tpu_custom_call.1} parent=1 // pred_fallthru
      _
    %77 = vsyncpa [#allocation3], 1
    %78 = vsyncpa [#allocation6], 1
    %79 = vsyncpa [#allocation4], 1

</llo_original>
